<compile_context>
chip_gen: v7x
topology: tpu7x:2x2x1
jax: 0.10.0
libtpu: 0.0.40
codegen_flags: <defaults>
</compile_context>

<pallas_src>
import jax
import jax.numpy as jnp
from jax.experimental import pallas as pl
from jax.experimental.pallas import tpu as pltpu


def _round_up(x: int, m: int) -> int:
    return (x + m - 1) // m * m


def _cdiv(x: int, m: int) -> int:
    return (x + m - 1) // m


def _bahdanau_kernel(pq_ref, v_ref, mem_ref, out_ref):
    # pq_ref : (Bt, dim)      processed_query tile (query @ Wq^T), storage dtype
    # v_ref  : (1, dim)       Linear(dim, 1) weight as a row vector
    # mem_ref: (Bt, Tt, dim)  processed_memory tile (streamed, never padded)
    # out_ref: (Bt, Tt)       alignment tile (T on the lane axis)
    pq = pq_ref[...]                                   # (Bt, dim)
    v = v_ref[...]                                     # (1, dim)
    mem = mem_ref[...]                                 # (Bt, Tt, dim)

    # add (VPU) + tanh (EUP) in the storage dtype (bf16-native on v6e/v7x).
    s = jnp.tanh(pq[:, None, :] + mem)                 # (Bt, Tt, dim)
    # dim -> 1 projection: VPU mul + XLU lane reduce, accumulated in f32.
    prod = (s * v[:, None, :]).astype(jnp.float32)     # (Bt, Tt, dim)
    out_ref[...] = jnp.sum(prod, axis=-1).astype(out_ref.dtype)


def bahdanau_attention(query, processed_memory, wq_t, v_col, *, block_t=None):
    """BahdanauAttention forward.

    query:            (B, dim) or (B, 1, dim)
    processed_memory: (B, T, dim)  — streamed as-is (cast to bf16 upstream if desired)
    wq_t:             (dim, dim)   transposed Linear(dim, dim) weight (q @ wq_t == Linear(q))
    v_col:            (dim, 1)     Linear(dim, 1) weight as a column
    Returns (B, T) alignment scores in processed_memory.dtype.
    """
    if query.ndim == 3:
        query = query[:, 0, :]                         # (B, 1, dim) -> (B, dim)
    B, dim = query.shape
    Bm, T, dim_m = processed_memory.shape
    assert (Bm, dim_m) == (B, dim), (query.shape, processed_memory.shape)

    mem_dtype = processed_memory.dtype
    out_dtype = mem_dtype
    itemsize = jnp.dtype(mem_dtype).itemsize

    # Hoist the tiny O(B*dim^2) Wq matmul out of the streaming kernel; only the
    # *small* operands are cast so the in-kernel add/tanh run in mem_dtype.
    pq = jnp.dot(query.astype(jnp.float32), wq_t.astype(jnp.float32),
                 preferred_element_type=jnp.float32).astype(mem_dtype)   # (B, dim)
    v_row = v_col.reshape(1, dim).astype(mem_dtype)                      # (1, dim)

    # ---- Tile geometry (no padding of processed_memory at all). ----
    Bt = 8 if B >= 8 else B                            # sublane axis of pq/out blocks
    if T <= 256:
        Tt = T                                         # single full-extent time tile
    else:
        # 128-multiple Tt targeting ~4 MiB per memory tile (cap 2048 rows), so
        # 2x double-buffered input + the (Bt,Tt,dim) intermediates fit VMEM on
        # every generation (v7x: 64 MiB physical).
        rows = max(128, (4 << 20) // max(1, Bt * dim * itemsize))
        cap = min(2048, (rows // 128) * 128)
        if block_t is not None:
            cap = min(cap, max(128, (block_t // 128) * 128))
        nt = _cdiv(T, cap)
        Tt = min(_round_up(_cdiv(T, nt), 128), (T // 128) * 128)
        # Megacore guard (v7x has 2 TensorCores): expose >= 4 grid steps when
        # it only costs tile size, not correctness.
        while Tt >= 512 and _cdiv(B, Bt) * _cdiv(T, Tt) < 4:
            Tt = max(128, (Tt // 2 // 128) * 128)

    grid = (_cdiv(B, Bt), _cdiv(T, Tt))

    cost = pl.CostEstimate(
        flops=3 * B * T * dim,                         # add + mul + reduce-add
        transcendentals=B * T * dim,                   # tanh
        bytes_accessed=(processed_memory.size * itemsize
                        + pq.size * itemsize
                        + v_row.size * itemsize
                        + B * T * jnp.dtype(out_dtype).itemsize),
    )

    out = pl.pallas_call(
        _bahdanau_kernel,
        out_shape=jax.ShapeDtypeStruct((B, T), out_dtype),
        grid=grid,
        in_specs=[
            pl.BlockSpec((Bt, dim), lambda b, t: (b, 0)),          # pq tile
            pl.BlockSpec((1, dim), lambda b, t: (0, 0)),           # v row (resident)
            pl.BlockSpec((Bt, Tt, dim), lambda b, t: (b, t, 0)),   # memory tile
        ],
        out_specs=pl.BlockSpec((Bt, Tt), lambda b, t: (b, t)),
        compiler_params=pltpu.CompilerParams(
            dimension_semantics=("parallel", "parallel"),
            vmem_limit_bytes=48 * 1024 * 1024,
        ),
        cost_estimate=cost,
    )(pq, v_row, processed_memory)

    return out


def reference(query, processed_memory, wq_t, v_col):
    if query.ndim == 2:
        query = query[:, None, :]
    pq = query.astype(jnp.float32) @ wq_t.astype(jnp.float32)        # (B, 1, dim)
    s = jnp.tanh(pq + processed_memory.astype(jnp.float32))          # (B, T, dim)
    return (s @ v_col.astype(jnp.float32))[..., 0]                   # (B, T)


if __name__ == "__main__":
    key = jax.random.PRNGKey(0)
    k_q, k_m, k_wq, k_v = jax.random.split(key, 4)

    B, T, dim = 2, 8, 32
    query = jax.random.normal(k_q, (B, dim), dtype=jnp.float32)
    processed_memory = jax.random.normal(k_m, (B, T, dim), dtype=jnp.float32)

    # Deterministic parameter init mimicking nn.Linear's uniform(-1/sqrt(fan_in), +).
    bound = 1.0 / jnp.sqrt(jnp.float32(dim))
    wq = jax.random.uniform(k_wq, (dim, dim), jnp.float32, -bound, bound)   # torch (out, in)
    v_w = jax.random.uniform(k_v, (1, dim), jnp.float32, -bound, bound)     # torch (1, dim)
    wq_t = wq.T                   # (dim, dim), so q @ wq_t == Linear(q)
    v_col = v_w.T                 # (dim, 1)

    ref = reference(query, processed_memory, wq_t, v_col)

    # f32 path, (B, dim) query
    out = jax.block_until_ready(bahdanau_attention(query, processed_memory, wq_t, v_col))
    assert out.shape == (B, T), out.shape
    assert jnp.allclose(out, ref, atol=1e-5, rtol=1e-5)

    # (B, 1, dim) query path
    out3 = jax.block_until_ready(
        bahdanau_attention(query[:, None, :], processed_memory, wq_t, v_col))
    assert jnp.allclose(out3, ref, atol=1e-5, rtol=1e-5)

    # bf16-storage path: cast happens upstream (at the producer); wrapper/kernel
    # never re-materialize processed_memory, so bf16 genuinely halves HBM traffic.
    out_bf16 = jax.block_until_ready(
        bahdanau_attention(query.astype(jnp.bfloat16),
                           processed_memory.astype(jnp.bfloat16), wq_t, v_col))
    assert out_bf16.dtype == jnp.bfloat16
    assert jnp.allclose(out_bf16.astype(jnp.float32), ref, atol=3e-2, rtol=3e-2)

    # Multi-tile / ragged path: exercises the cdiv grid, ragged B and T tiles
    # (clipped input DMAs + masked tail stores), still small shapes.
    B2, T2 = 10, 300
    q2 = jax.random.normal(k_q, (B2, dim), dtype=jnp.float32)
    m2 = jax.random.normal(k_m, (B2, T2, dim), dtype=jnp.float32)
    ref2 = reference(q2, m2, wq_t, v_col)
    out2 = jax.block_until_ready(bahdanau_attention(q2, m2, wq_t, v_col))
    assert out2.shape == (B2, T2), out2.shape
    assert jnp.allclose(out2, ref2, atol=1e-4, rtol=1e-4)

    print("KERNEL_OK")
</pallas_src>

<mosaic_0001>
module attributes {stable_mosaic.version = 11 : i64} {
  func.func @_bahdanau_kernel(%arg0: i32, %arg1: i32, %arg2: memref<2x32xf32, #tpu.memory_space<vmem>>, %arg3: memref<1x32xf32, #tpu.memory_space<vmem>>, %arg4: memref<2x8x32xf32, #tpu.memory_space<vmem>>, %arg5: memref<2x8xf32, #tpu.memory_space<vmem>>) attributes {dimension_semantics = [#tpu.dimension_semantics<parallel>, #tpu.dimension_semantics<parallel>], iteration_bounds = array<i64: 1, 1>, scalar_prefetch = 0 : i64, scratch_operands = 0 : i64, tpu.core_type = #tpu.core_type<tc>, window_params = [{transform_indices = @transform_0, window_bounds = array<i64: 2, 32>}, {pipeline_mode = #tpu.pipeline_mode<synchronous>, transform_indices = @transform_1, window_bounds = array<i64: 1, 32>}, {transform_indices = @transform_2, window_bounds = array<i64: 2, 8, 32>}, {transform_indices = @transform_3, window_bounds = array<i64: 2, 8>}]} {
    %c0 = arith.constant 0 : index
    %c0_0 = arith.constant 0 : index
    %0 = vector.load %arg2[%c0, %c0_0] : memref<2x32xf32, #tpu.memory_space<vmem>>, vector<2x32xf32>
    %c0_1 = arith.constant 0 : index
    %c0_2 = arith.constant 0 : index
    %1 = vector.load %arg3[%c0_1, %c0_2] : memref<1x32xf32, #tpu.memory_space<vmem>>, vector<1x32xf32>
    %c0_3 = arith.constant 0 : index
    %c0_4 = arith.constant 0 : index
    %c0_5 = arith.constant 0 : index
    %2 = vector.load %arg4[%c0_3, %c0_4, %c0_5] : memref<2x8x32xf32, #tpu.memory_space<vmem>>, vector<2x8x32xf32>
    %3 = vector.shape_cast %0 : vector<2x32xf32> to vector<2x1x32xf32>
    %4 = vector.broadcast %3 : vector<2x1x32xf32> to vector<2x8x32xf32>
    %5 = arith.addf %4, %2 : vector<2x8x32xf32>
    %6 = math.tanh %5 : vector<2x8x32xf32>
    %7 = vector.shape_cast %1 : vector<1x32xf32> to vector<1x1x32xf32>
    %8 = vector.broadcast %7 : vector<1x1x32xf32> to vector<2x8x32xf32>
    %9 = arith.mulf %6, %8 : vector<2x8x32xf32>
    %cst = arith.constant dense<0.000000e+00> : vector<2x8xf32>
    %10 = vector.multi_reduction <add>, %9, %cst [2] : vector<2x8x32xf32> to vector<2x8xf32>
    %c0_6 = arith.constant 0 : index
    %c0_7 = arith.constant 0 : index
    %11 = vector.load %arg5[%c0_6, %c0_7] : memref<2x8xf32, #tpu.memory_space<vmem>>, vector<2x8xf32>
    tpu.vector_store %arg5[%c0_6, %c0_7], %10 {strides = array<i32>} : memref<2x8xf32, #tpu.memory_space<vmem>>, vector<2x8xf32>,
    return
  }
  func.func @transform_0(%arg0: i32, %arg1: i32) -> (i32, i32) {
    %c0_i32 = arith.constant 0 : i32
    %c0_i32_0 = arith.constant 0 : i32
    return %arg0, %c0_i32 : i32, i32
  }
  func.func @transform_1(%arg0: i32, %arg1: i32) -> (i32, i32) {
    %c0_i32 = arith.constant 0 : i32
    %c0_i32_0 = arith.constant 0 : i32
    %c0_i32_1 = arith.constant 0 : i32
    return %c0_i32, %c0_i32_0 : i32, i32
  }
  func.func @transform_2(%arg0: i32, %arg1: i32) -> (i32, i32, i32) {
    %c0_i32 = arith.constant 0 : i32
    %c0_i32_0 = arith.constant 0 : i32
    return %arg0, %arg1, %c0_i32 : i32, i32, i32
  }
  func.func @transform_3(%arg0: i32, %arg1: i32) -> (i32, i32) {
    %c0_i32 = arith.constant 0 : i32
    return %arg0, %arg1 : i32, i32
  }
}

</mosaic_0001>

<llo_original>
// kernel: tpu_custom_call.1
$region0: #{tpu_custom_call.1}
  #allocation0 [shape = 'u32[]', space=smem, size = 0x4, offset = 0x4, fixed_abs, tag = 'smem constant byte address 0x4 - core index']
  #allocation1 [shape = 'u32[144,128]{1,0:T(1,128)}', space=vmem, size = 0x12000, scoped, tag = 'internal scratch']
  %s0 = inlined_call_operand.hbm [shape: f32[2,32], index: 0, kind: input, shape index: {}]
  %s1 = inlined_call_operand.vmem [shape: f32[1,32], index: 1, kind: input, shape index: {}]
  %s2 = inlined_call_operand.hbm [shape: f32[2,8,32], index: 2, kind: input, shape index: {}]
  %s3 = inlined_call_operand.hbm [shape: f32[2,8], index: 3, kind: output, shape index: {}]
  %s4 = sld [smem:[#allocation0]]
  $region30: #{tpu_custom_call.1} parent=0
    _
  %s6 = ssub.s32 1, %s4
  %s7 = scalar_select 0, %s6, %s4
  $region1: #{tpu_custom_call.1} parent=0
    #allocation2 [shape = 'u8[1024]{0}', space=vmem, size = 0x400, scoped, tag = 'input window, operand 0, single buffered']
    #allocation3 [shape = 's32[1]{0}', space=sflag, size = 0x4, scoped, tag = 'scoped memory for tpu_custom_call.1']
    #allocation4 [shape = 's32[1]{0}', space=sflag, size = 0x4, scoped, tag = 'scoped memory for tpu_custom_call.1']
    #allocation5 [shape = 'u8[8192]{0}', space=vmem, size = 0x2000, scoped, tag = 'input window, operand 2, single buffered']
    #allocation6 [shape = 's32[1]{0}', space=sflag, size = 0x4, scoped, tag = 'scoped memory for tpu_custom_call.1']
    #allocation7 [shape = 'u8[1024]{0}', space=vmem, size = 0x400, scoped, tag = 'output window, operand 0, single buffered']
    %8 = vsyncpa [#allocation3], 0
    %9 = vsyncpa [#allocation6], 0
    %10 = vsyncpa [#allocation4], 0
    // Predicated region
    $region2: #{tpu_custom_call.1} parent=1 // pred_check
      _
    $region3: #{tpu_custom_call.1} parent=1 // pred_check_branch
      %12 = sbr.rel (0) target = $region5
    $region4: #{tpu_custom_call.1} parent=1 // pred_region
      %s14 = ssub.s32 32, 32
      %15 = vsyncadd [#allocation3], %s14
      %s17 = sshll.u32 [#allocation2], 4
      %s18 = int_to_ptr.vmem [resolvable:$true] %s17
      %20 = dma.hbm_to_vmem [thread:$0]  %s0, 32, %s18, [#allocation3]
    $region5: #{tpu_custom_call.1} parent=1 // pred_fallthru
      _
    // Predicated region
    $region6: #{tpu_custom_call.1} parent=1 // pred_check
      _
    $region7: #{tpu_custom_call.1} parent=1 // pred_check_branch
      %22 = sbr.rel (0) target = $region9
    $region8: #{tpu_custom_call.1} parent=1 // pred_region
      _
    $region9: #{tpu_custom_call.1} parent=1 // pred_fallthru
      _
    // Predicated region
    $region10: #{tpu_custom_call.1} parent=1 // pred_check
      _
    $region11: #{tpu_custom_call.1} parent=1 // pred_check_branch
      %24 = sbr.rel (0) target = $region13
    $region12: #{tpu_custom_call.1} parent=1 // pred_region
      %s26 = ssub.s32 256, 256
      %27 = vsyncadd [#allocation6], %s26
      %s28 = sshll.u32 [#allocation5], 4
      %s29 = int_to_ptr.vmem [resolvable:$true] %s28
      %34 = dma.hbm_to_vmem [thread:$0]  %s2, 256, %s29, [#allocation6], 128, 128, 8
    $region13: #{tpu_custom_call.1} parent=1 // pred_fallthru
      _
    // Predicated region
    $region14: #{tpu_custom_call.1} parent=1 // pred_check
      _
    $region15: #{tpu_custom_call.1} parent=1 // pred_check_branch
      %36 = sbr.rel (0) target = $region17
    $region16: #{tpu_custom_call.1} parent=1 // pred_region
      %37 = dma.done [#allocation3], 32
    $region17: #{tpu_custom_call.1} parent=1 // pred_fallthru
      _
    // Predicated region
    $region18: #{tpu_custom_call.1} parent=1 // pred_check
      _
    $region19: #{tpu_custom_call.1} parent=1 // pred_check_branch
      %39 = sbr.rel (0) target = $region21
    $region20: #{tpu_custom_call.1} parent=1 // pred_region
      %40 = dma.done [#allocation6], 256
    $region21: #{tpu_custom_call.1} parent=1 // pred_fallthru
      _
    %v41 = vld [vmem:[#allocation2] sm:$0x3]
    %v42 = vld [vmem:[%s1] sm:$0x1]
    %v43 = vld [vmem:[#allocation5] sm:$0xff]
    %v44 = vld [vmem:[#allocation5 + $0x8] sm:$0xff]
    %v47 = vunpack.c.l.s4 1966171168
    %v48 = vunpack.c.0.s8 %v47
    %v49 = vlaneseq
    %v50 = vshrl.u32 %v49, 7
    %v51 = vsub.s32 %v48, %v50
    %v52 = vrot.slane %v41, %v51
    %v53 = vcombine.high %v52, %v52
    %v55 = vunpack.c.l.s4 1966171168
    %v56 = vunpack.c.0.s8 %v55
    %v57 = vlaneseq
    %v58 = vshrl.u32 %v57, 7
    %v59 = vsub.s32 %v56, %v58
    %v60 = vrot.slane %v52, %v59
    %v62 = vunpack.c.l.s4 1966171168
    %v63 = vunpack.c.0.s8 %v62
    %v64 = vlaneseq
    %v65 = vshrl.u32 %v64, 7
    %v66 = vsub.s32 %v63, %v65
    %v67 = vrot.slane %v53, %v66
    %v68 = vlaneseq
    %v69 = vshrl.u32 %v68, 7
    %v70 = vsub.s32 0, %v69
    %v71 = vrot.slane %v60, %v70
    %v72 = vlaneseq
    %v73 = vshrl.u32 %v72, 7
    %v74 = vsub.s32 0, %v73
    %v75 = vrot.slane %v67, %v74
    %v78 = vadd.f32 %v71, %v43
    %v79 = vadd.f32 %v75, %v44
    %v80 = vtanh.pop %v78
    %v81 = vtanh.pop %v79
    %v83 = vlaneseq
    %v84 = vshrl.u32 %v83, 7
    %v85 = vsub.s32 0, %v84
    %v86 = vrot.slane %v42, %v85
    %v88 = vmul.f32 %v80, %v86
    %v89 = vmul.f32 %v81, %v86
    %vm90 = vcmask 261120
    %v91 = vsel %vm90, %v88, 0.0
    %92 = vadd.xlane.f32.xlu0 %v91
    %v93 = vpop.xlane.xlu0 %92
    %v94 = vsel %vm90, %v89, 0.0
    %95 = vadd.xlane.f32.xlu0 %v94
    %v96 = vpop.xlane.xlu0 %95
    %v99 = vlaneseq
    %v100 = vand.u32 %v99, 127
    %v101 = vlaneseq
    %v102 = vshrl.u32 %v101, 7
    %v103 = vsub.s32 %v100, %v102
    %v104 = vrot.slane %v93, %v103
    %v105 = vlaneseq
    %v106 = vshrl.u32 %v105, 7
    %v107 = vsub.s32 %v100, %v106
    %v108 = vrot.slane %v96, %v107
    %vm109 = vcmask 1041409
    %v110 = vsel %vm109, %v108, %v104
    %vm112 = vcmask 58368
    %113 = vst.msk [vmem:[#allocation7] sm:$0x3] %vm112, %v110
    // Predicated region
    $region22: #{tpu_custom_call.1} parent=1 // pred_check
      _
    $region23: #{tpu_custom_call.1} parent=1 // pred_check_branch
      %115 = sbr.rel (0) target = $region25
    $region24: #{tpu_custom_call.1} parent=1 // pred_region
      %s117 = ssub.s32 32, 32
      %118 = vsyncadd [#allocation4], %s117
      %s120 = sshll.u32 [#allocation7], 4
      %s121 = int_to_ptr.vmem [resolvable:$true] %s120
      %123 = dma.vmem_to_hbm [thread:$0]  %s121, 32, %s3, [#allocation4]
    $region25: #{tpu_custom_call.1} parent=1 // pred_fallthru
      _
    // Predicated region
    $region26: #{tpu_custom_call.1} parent=1 // pred_check
      _
    $region27: #{tpu_custom_call.1} parent=1 // pred_check_branch
      %125 = sbr.rel (0) target = $region29
    $region28: #{tpu_custom_call.1} parent=1 // pred_region
      %126 = dma.done [#allocation4], 32
    $region29: #{tpu_custom_call.1} parent=1 // pred_fallthru
      _
    %127 = vsyncpa [#allocation3], 1
    %128 = vsyncpa [#allocation6], 1
    %129 = vsyncpa [#allocation4], 1

</llo_original>
